<compile_context>
chip_gen: v5e
topology: v5e:2x2
jax: 0.10.0
libtpu: 0.0.40
codegen_flags: <defaults>
</compile_context>

<pallas_src>
import functools

import jax
import jax.numpy as jnp
from jax.experimental import pallas as pl
from jax.experimental.pallas import tpu as pltpu


def _leaky_relu(x, slope=0.2):
    return jnp.where(x > 0, x, slope * x)


def _disc_kernel(final_iid, x_ref,
                 w1_ref, b1_ref, w2_ref, b2_ref, w3_ref, b3_ref,
                 w4_ref, b4_ref, *rest):
    """Per-tile body.  x_ref: (C, T) raw pixels; output o_ref: (1, T)."""
    if final_iid:
        w5_ref, b5_ref, o_ref = rest
    else:
        (o_ref,) = rest

    cdt = w1_ref.dtype  # bf16 (default) or f32 MXU operands

    # Normalization (obs/255 - 0.5) in f32 on the VPU, hidden under the MXU.
    x = x_ref[...].astype(jnp.float32) * (1.0 / 255.0) - 0.5          # (C, T)

    h = jnp.dot(w1_ref[...], x.astype(cdt),
                preferred_element_type=jnp.float32) + b1_ref[...]     # (32, T)
    h = _leaky_relu(h)
    h = jnp.dot(w2_ref[...], h.astype(cdt),
                preferred_element_type=jnp.float32) + b2_ref[...]     # (64, T)
    h = _leaky_relu(h)
    h = jnp.dot(w3_ref[...], h.astype(cdt),
                preferred_element_type=jnp.float32) + b3_ref[...]     # (128, T)
    h = _leaky_relu(h)

    # 128 -> 1: broadcast-multiply (VPU) + sublane reduction (XLU) keeps the
    # MXU free and the result lane-dense.
    h = jnp.sum(h * w4_ref[...], axis=0, keepdims=True) + b4_ref[...]  # (1, T)

    if final_iid:
        h = _leaky_relu(h)
        h = h * w5_ref[...] + b5_ref[...]                              # (1, T)

    o_ref[...] = h.astype(o_ref.dtype)


def init_params(key, in_dim, final_iid=False):
    """Weights stored PyTorch-style: w (Cout, Cin), b (Cout,), all f32."""
    dims = [(in_dim, 32), (32, 64), (64, 128), (128, 1)]
    if final_iid:
        dims.append((1, 1))
    params = []
    for cin, cout in dims:
        key, wk, bk = jax.random.split(key, 3)
        w = jax.random.normal(wk, (cout, cin), jnp.float32) / jnp.sqrt(cin)
        b = 0.1 * jax.random.normal(bk, (cout,), jnp.float32)
        params.append((w, b))
    return params


def iid_patch_discriminator(obs_nchw, params, *, final_iid=False,
                            tile_p=2048, use_bf16=True):
    """Forward pass.  obs_nchw: (N, C, H, W).  Returns (N, 1, H, W) float32."""
    N, C, H, W = obs_nchw.shape
    P = H * W

    # NCHW is contiguously (N, C, H*W): a free view, no transpose needed.
    x = obs_nchw.reshape(N, C, P)

    # Lane-dense pixel tiles: multiple of 128, capped at the (padded) row size.
    tp = min(int(tile_p), pl.cdiv(P, 128) * 128)
    tp = max(128, (tp // 128) * 128)
    P_pad = pl.cdiv(P, tp) * tp
    if P_pad != P:
        x = jnp.pad(x, ((0, 0), (0, 0), (0, P_pad - P)))

    cdt = jnp.bfloat16 if use_bf16 else jnp.float32
    n_mxu = len(params) - (2 if final_iid else 1)   # layers that use the MXU

    const2 = lambda n, p: (0, 0)                    # resident params (fetched once)
    ops, param_specs = [], []
    for i, (w, b) in enumerate(params):
        if i < n_mxu:
            wk = w.astype(cdt)                      # (Cout, Cin) MXU operand
        elif i == n_mxu:
            wk = jnp.transpose(w).astype(jnp.float32)   # (128, 1) column for VPU/XLU
        else:
            wk = w.astype(jnp.float32)              # (1, 1) final_iid scalar
        bk = b.reshape(-1, 1).astype(jnp.float32)   # (Cout, 1), broadcast over lanes
        ops += [wk, bk]
        param_specs += [pl.BlockSpec(wk.shape, const2),
                        pl.BlockSpec(bk.shape, const2)]

    grid = (N, P_pad // tp)
    x_spec = pl.BlockSpec((None, C, tp), lambda n, p: (n, 0, p))
    out_spec = pl.BlockSpec((None, 1, tp), lambda n, p: (n, 0, p))

    flops = 2 * N * P * (C * 32 + 32 * 64 + 64 * 128 + 128)
    if final_iid:
        flops += 2 * N * P
    bytes_accessed = (x.size * x.dtype.itemsize
                      + N * P_pad * 4
                      + sum(int(o.size) * o.dtype.itemsize for o in ops))

    out = pl.pallas_call(
        functools.partial(_disc_kernel, final_iid),
        out_shape=jax.ShapeDtypeStruct((N, 1, P_pad), jnp.float32),
        grid_spec=pltpu.PrefetchScalarGridSpec(
            num_scalar_prefetch=0,
            grid=grid,
            in_specs=[x_spec] + param_specs,
            out_specs=out_spec,
        ),
        compiler_params=pltpu.CompilerParams(
            dimension_semantics=("parallel", "parallel")),
        cost_estimate=pl.CostEstimate(
            flops=flops, transcendentals=0, bytes_accessed=bytes_accessed),
    )(x, *ops)

    # Drop pixel padding; (N, 1, H*W) -> (N, 1, H, W) is a free reshape.
    return out[:, :, :P].reshape(N, 1, H, W)


def _reference(obs_nchw, params, *, final_iid=False):
    """Plain-JAX f32 reference matching the PyTorch module semantics."""
    N, C, H, W = obs_nchw.shape
    x = jnp.transpose(obs_nchw.astype(jnp.float32), (0, 2, 3, 1)).reshape(-1, C)
    h = x / 255.0 - 0.5
    for i, (w, b) in enumerate(params):
        h = jnp.dot(h, jnp.transpose(w),
                    preferred_element_type=jnp.float32) + b[None, :]
        if i != len(params) - 1:
            h = jnp.where(h > 0, h, 0.2 * h)
    out = h.reshape(N, H, W, 1)
    return jnp.transpose(out, (0, 3, 1, 2))


if __name__ == "__main__":
    key = jax.random.PRNGKey(0)
    k_obs, k_par = jax.random.split(key)

    # Small shapes consistent with the module: batch=2, in_dim=4, spatial=16.
    N, C, H, W = 2, 4, 16, 16
    obs = jax.random.uniform(k_obs, (N, C, H, W), jnp.float32,
                             minval=0.0, maxval=255.0)

    params = init_params(k_par, in_dim=C, final_iid=False)
    ref = _reference(obs, params, final_iid=False)

    # f32 MXU path (tight check).
    out_f32 = jax.block_until_ready(
        iid_patch_discriminator(obs, params, final_iid=False, use_bf16=False))
    assert out_f32.shape == (N, 1, H, W), out_f32.shape
    assert jnp.allclose(out_f32, ref, atol=1e-3, rtol=1e-3), \
        float(jnp.max(jnp.abs(out_f32 - ref)))

    # bf16 MXU path (default; looser tolerance vs f32 reference).
    out_bf16 = jax.block_until_ready(
        iid_patch_discriminator(obs, params, final_iid=False, use_bf16=True))
    assert out_bf16.shape == (N, 1, H, W), out_bf16.shape
    assert jnp.allclose(out_bf16, ref, atol=3e-2, rtol=3e-2), \
        float(jnp.max(jnp.abs(out_bf16 - ref)))

    # final_iid path (extra 1x1 conv after a LeakyReLU).
    params5 = init_params(k_par, in_dim=C, final_iid=True)
    ref5 = _reference(obs, params5, final_iid=True)
    out5 = jax.block_until_ready(
        iid_patch_discriminator(obs, params5, final_iid=True, use_bf16=False))
    assert out5.shape == (N, 1, H, W), out5.shape
    assert jnp.allclose(out5, ref5, atol=1e-3, rtol=1e-3), \
        float(jnp.max(jnp.abs(out5 - ref5)))

    print("KERNEL_OK")
</pallas_src>

<mosaic_0001>
module attributes {stable_mosaic.version = 11 : i64} {
  func.func @_disc_kernel(%arg0: i32, %arg1: i32, %arg2: memref<1x4x256xf32, #tpu.memory_space<vmem>>, %arg3: memref<32x4xf32, #tpu.memory_space<vmem>>, %arg4: memref<32x1xf32, #tpu.memory_space<vmem>>, %arg5: memref<64x32xf32, #tpu.memory_space<vmem>>, %arg6: memref<64x1xf32, #tpu.memory_space<vmem>>, %arg7: memref<128x64xf32, #tpu.memory_space<vmem>>, %arg8: memref<128x1xf32, #tpu.memory_space<vmem>>, %arg9: memref<128x1xf32, #tpu.memory_space<vmem>>, %arg10: memref<1x1xf32, #tpu.memory_space<vmem>>, %arg11: memref<1x1x256xf32, #tpu.memory_space<vmem>>) attributes {dimension_semantics = [#tpu.dimension_semantics<parallel>, #tpu.dimension_semantics<parallel>], iteration_bounds = array<i64: 2, 1>, scalar_prefetch = 0 : i64, scratch_operands = 0 : i64, tpu.core_type = #tpu.core_type<tc>, window_params = [{transform_indices = @transform_0, window_bounds = array<i64: 1, 4, 256>}, {pipeline_mode = #tpu.pipeline_mode<synchronous>, transform_indices = @transform_1, window_bounds = array<i64: 32, 4>}, {pipeline_mode = #tpu.pipeline_mode<synchronous>, transform_indices = @transform_2, window_bounds = array<i64: 32, 1>}, {pipeline_mode = #tpu.pipeline_mode<synchronous>, transform_indices = @transform_3, window_bounds = array<i64: 64, 32>}, {pipeline_mode = #tpu.pipeline_mode<synchronous>, transform_indices = @transform_4, window_bounds = array<i64: 64, 1>}, {pipeline_mode = #tpu.pipeline_mode<synchronous>, transform_indices = @transform_5, window_bounds = array<i64: 128, 64>}, {pipeline_mode = #tpu.pipeline_mode<synchronous>, transform_indices = @transform_6, window_bounds = array<i64: 128, 1>}, {pipeline_mode = #tpu.pipeline_mode<synchronous>, transform_indices = @transform_7, window_bounds = array<i64: 128, 1>}, {pipeline_mode = #tpu.pipeline_mode<synchronous>, transform_indices = @transform_8, window_bounds = array<i64: 1, 1>}, {transform_indices = @transform_9, window_bounds = array<i64: 1, 1, 256>}]} {
    %c0 = arith.constant 0 : index
    %c0_0 = arith.constant 0 : index
    %c0_1 = arith.constant 0 : index
    %0 = vector.load %arg2[%c0, %c0_0, %c0_1] : memref<1x4x256xf32, #tpu.memory_space<vmem>>, vector<1x4x256xf32>
    %1 = vector.shape_cast %0 : vector<1x4x256xf32> to vector<4x256xf32>
    %cst = arith.constant 0.00392156886 : f32
    %2 = vector.broadcast %cst : f32 to vector<4x256xf32>
    %3 = arith.mulf %1, %2 : vector<4x256xf32>
    %cst_2 = arith.constant 5.000000e-01 : f32
    %4 = vector.broadcast %cst_2 : f32 to vector<4x256xf32>
    %5 = arith.subf %3, %4 : vector<4x256xf32>
    %c0_3 = arith.constant 0 : index
    %c0_4 = arith.constant 0 : index
    %6 = vector.load %arg3[%c0_3, %c0_4] : memref<32x4xf32, #tpu.memory_space<vmem>>, vector<32x4xf32>
    %cst_5 = arith.constant dense<0.000000e+00> : vector<32x256xf32>
    %7 = tpu.matmul %6, %5, %cst_5 {dimension_numbers = #tpu.dot_dimension_numbers<[1], [0], [0], [1], [0, 0, 1, 1], [], []>} : vector<32x4xf32>, vector<4x256xf32>, vector<32x256xf32> -> vector<32x256xf32>
    %c0_6 = arith.constant 0 : index
    %c0_7 = arith.constant 0 : index
    %8 = vector.load %arg4[%c0_6, %c0_7] : memref<32x1xf32, #tpu.memory_space<vmem>>, vector<32x1xf32>
    %9 = vector.broadcast %8 : vector<32x1xf32> to vector<32x256xf32>
    %10 = arith.addf %7, %9 : vector<32x256xf32>
    %cst_8 = arith.constant 0.000000e+00 : f32
    %11 = vector.broadcast %cst_8 : f32 to vector<32x256xf32>
    %12 = arith.cmpf ogt, %10, %11 : vector<32x256xf32>
    %cst_9 = arith.constant 2.000000e-01 : f32
    %13 = vector.broadcast %cst_9 : f32 to vector<32x256xf32>
    %14 = arith.mulf %13, %10 : vector<32x256xf32>
    %15 = arith.select %12, %10, %14 : vector<32x256xi1>, vector<32x256xf32>
    %c0_10 = arith.constant 0 : index
    %c0_11 = arith.constant 0 : index
    %16 = vector.load %arg5[%c0_10, %c0_11] : memref<64x32xf32, #tpu.memory_space<vmem>>, vector<64x32xf32>
    %cst_12 = arith.constant dense<0.000000e+00> : vector<64x256xf32>
    %17 = tpu.matmul %16, %15, %cst_12 {dimension_numbers = #tpu.dot_dimension_numbers<[1], [0], [0], [1], [0, 0, 1, 1], [], []>} : vector<64x32xf32>, vector<32x256xf32>, vector<64x256xf32> -> vector<64x256xf32>
    %c0_13 = arith.constant 0 : index
    %c0_14 = arith.constant 0 : index
    %18 = vector.load %arg6[%c0_13, %c0_14] : memref<64x1xf32, #tpu.memory_space<vmem>>, vector<64x1xf32>
    %19 = vector.broadcast %18 : vector<64x1xf32> to vector<64x256xf32>
    %20 = arith.addf %17, %19 : vector<64x256xf32>
    %cst_15 = arith.constant 0.000000e+00 : f32
    %21 = vector.broadcast %cst_15 : f32 to vector<64x256xf32>
    %22 = arith.cmpf ogt, %20, %21 : vector<64x256xf32>
    %cst_16 = arith.constant 2.000000e-01 : f32
    %23 = vector.broadcast %cst_16 : f32 to vector<64x256xf32>
    %24 = arith.mulf %23, %20 : vector<64x256xf32>
    %25 = arith.select %22, %20, %24 : vector<64x256xi1>, vector<64x256xf32>
    %c0_17 = arith.constant 0 : index
    %c0_18 = arith.constant 0 : index
    %26 = vector.load %arg7[%c0_17, %c0_18] : memref<128x64xf32, #tpu.memory_space<vmem>>, vector<128x64xf32>
    %cst_19 = arith.constant dense<0.000000e+00> : vector<128x256xf32>
    %27 = tpu.matmul %26, %25, %cst_19 {dimension_numbers = #tpu.dot_dimension_numbers<[1], [0], [0], [1], [0, 0, 1, 1], [], []>} : vector<128x64xf32>, vector<64x256xf32>, vector<128x256xf32> -> vector<128x256xf32>
    %c0_20 = arith.constant 0 : index
    %c0_21 = arith.constant 0 : index
    %28 = vector.load %arg8[%c0_20, %c0_21] : memref<128x1xf32, #tpu.memory_space<vmem>>, vector<128x1xf32>
    %29 = vector.broadcast %28 : vector<128x1xf32> to vector<128x256xf32>
    %30 = arith.addf %27, %29 : vector<128x256xf32>
    %cst_22 = arith.constant 0.000000e+00 : f32
    %31 = vector.broadcast %cst_22 : f32 to vector<128x256xf32>
    %32 = arith.cmpf ogt, %30, %31 : vector<128x256xf32>
    %cst_23 = arith.constant 2.000000e-01 : f32
    %33 = vector.broadcast %cst_23 : f32 to vector<128x256xf32>
    %34 = arith.mulf %33, %30 : vector<128x256xf32>
    %35 = arith.select %32, %30, %34 : vector<128x256xi1>, vector<128x256xf32>
    %c0_24 = arith.constant 0 : index
    %c0_25 = arith.constant 0 : index
    %36 = vector.load %arg9[%c0_24, %c0_25] : memref<128x1xf32, #tpu.memory_space<vmem>>, vector<128x1xf32>
    %37 = vector.broadcast %36 : vector<128x1xf32> to vector<128x256xf32>
    %38 = arith.mulf %35, %37 : vector<128x256xf32>
    %cst_26 = arith.constant dense<0.000000e+00> : vector<256xf32>
    %39 = vector.multi_reduction <add>, %38, %cst_26 [0] : vector<128x256xf32> to vector<256xf32>
    %40 = vector.shape_cast %39 : vector<256xf32> to vector<1x256xf32>
    %c0_27 = arith.constant 0 : index
    %c0_28 = arith.constant 0 : index
    %41 = vector.load %arg10[%c0_27, %c0_28] : memref<1x1xf32, #tpu.memory_space<vmem>>, vector<1x1xf32>
    %42 = vector.broadcast %41 : vector<1x1xf32> to vector<1x256xf32>
    %43 = arith.addf %40, %42 : vector<1x256xf32>
    %c0_29 = arith.constant 0 : index
    %c0_30 = arith.constant 0 : index
    %c0_31 = arith.constant 0 : index
    %44 = vector.load %arg11[%c0_29, %c0_30, %c0_31] : memref<1x1x256xf32, #tpu.memory_space<vmem>>, vector<1x1x256xf32>
    %45 = vector.shape_cast %44 : vector<1x1x256xf32> to vector<1x256xf32>
    %46 = vector.shape_cast %43 : vector<1x256xf32> to vector<1x1x256xf32>
    tpu.vector_store %arg11[%c0_29, %c0_30, %c0_31], %46 {strides = array<i32>} : memref<1x1x256xf32, #tpu.memory_space<vmem>>, vector<1x1x256xf32>,
    return
  }
  func.func @transform_0(%arg0: i32, %arg1: i32) -> (i32, i32, i32) {
    %c0_i32 = arith.constant 0 : i32
    %c0_i32_0 = arith.constant 0 : i32
    return %arg0, %c0_i32, %arg1 : i32, i32, i32
  }
  func.func @transform_1(%arg0: i32, %arg1: i32) -> (i32, i32) {
    %c0_i32 = arith.constant 0 : i32
    %c0_i32_0 = arith.constant 0 : i32
    %c0_i32_1 = arith.constant 0 : i32
    return %c0_i32, %c0_i32_0 : i32, i32
  }
  func.func @transform_2(%arg0: i32, %arg1: i32) -> (i32, i32) {
    %c0_i32 = arith.constant 0 : i32
    %c0_i32_0 = arith.constant 0 : i32
    %c0_i32_1 = arith.constant 0 : i32
    return %c0_i32, %c0_i32_0 : i32, i32
  }
  func.func @transform_3(%arg0: i32, %arg1: i32) -> (i32, i32) {
    %c0_i32 = arith.constant 0 : i32
    %c0_i32_0 = arith.constant 0 : i32
    %c0_i32_1 = arith.constant 0 : i32
    return %c0_i32, %c0_i32_0 : i32, i32
  }
  func.func @transform_4(%arg0: i32, %arg1: i32) -> (i32, i32) {
    %c0_i32 = arith.constant 0 : i32
    %c0_i32_0 = arith.constant 0 : i32
    %c0_i32_1 = arith.constant 0 : i32
    return %c0_i32, %c0_i32_0 : i32, i32
  }
  func.func @transform_5(%arg0: i32, %arg1: i32) -> (i32, i32) {
    %c0_i32 = arith.constant 0 : i32
    %c0_i32_0 = arith.constant 0 : i32
    %c0_i32_1 = arith.constant 0 : i32
    return %c0_i32, %c0_i32_0 : i32, i32
  }
  func.func @transform_6(%arg0: i32, %arg1: i32) -> (i32, i32) {
    %c0_i32 = arith.constant 0 : i32
    %c0_i32_0 = arith.constant 0 : i32
    %c0_i32_1 = arith.constant 0 : i32
    return %c0_i32, %c0_i32_0 : i32, i32
  }
  func.func @transform_7(%arg0: i32, %arg1: i32) -> (i32, i32) {
    %c0_i32 = arith.constant 0 : i32
    %c0_i32_0 = arith.constant 0 : i32
    %c0_i32_1 = arith.constant 0 : i32
    return %c0_i32, %c0_i32_0 : i32, i32
  }
  func.func @transform_8(%arg0: i32, %arg1: i32) -> (i32, i32) {
    %c0_i32 = arith.constant 0 : i32
    %c0_i32_0 = arith.constant 0 : i32
    %c0_i32_1 = arith.constant 0 : i32
    return %c0_i32, %c0_i32_0 : i32, i32
  }
  func.func @transform_9(%arg0: i32, %arg1: i32) -> (i32, i32, i32) {
    %c0_i32 = arith.constant 0 : i32
    %c0_i32_0 = arith.constant 0 : i32
    return %arg0, %c0_i32, %arg1 : i32, i32, i32
  }
}

</mosaic_0001>

<llo_original>
// kernel: tpu_custom_call.1
$region0: #{tpu_custom_call.1}
  #allocation0 [shape = 'u32[]', space=smem, size = 0x4, offset = 0x4, fixed_abs, tag = 'smem constant byte address 0x4 - core index']
  #allocation1 [shape = 'u32[72,128]{1,0:T(1,128)}', space=vmem, size = 0x9000, scoped, tag = 'internal scratch']
  #allocation2 [shape = 'f32[1,1]{1,0:T(1,128)S(1)}', space=vmem, size = 0x200, scoped, tag = 'scoped memory for tpu_custom_call.1']
  %s0 = inlined_call_operand.vmem [shape: f32[2,4,256], index: 0, kind: input, shape index: {}]
  %s1 = inlined_call_operand.vmem [shape: f32[32,4], index: 1, kind: input, shape index: {}]
  %s2 = inlined_call_operand.vmem [shape: f32[32,1], index: 2, kind: input, shape index: {}]
  %s3 = inlined_call_operand.vmem [shape: f32[64,32], index: 3, kind: input, shape index: {}]
  %s4 = inlined_call_operand.vmem [shape: f32[64,1], index: 4, kind: input, shape index: {}]
  %s5 = inlined_call_operand.vmem [shape: f32[128,64], index: 5, kind: input, shape index: {}]
  %s6 = inlined_call_operand.vmem [shape: f32[128,1], index: 6, kind: input, shape index: {}]
  %s7 = inlined_call_operand.vmem [shape: f32[128,1], index: 7, kind: input, shape index: {}]
  %s8 = inlined_call_operand.<no memory space> [shape: f32[1,1], index: 8, kind: input, shape index: {}]
  %s9 = inlined_call_operand.hbm [shape: f32[2,1,256], index: 9, kind: output, shape index: {}]
  %s10 = sld [smem:[#allocation0]]
  $region69: #{tpu_custom_call.1} parent=0
    _
  %s12 = ssub.s32 1, %s10
  %s13 = scalar_select 0, %s12, %s10
  %v14 = vstv %s8
  %15 = vst [vmem:[#allocation2] sm:$0x1] %v14
  $region1: #{tpu_custom_call.1} parent=0
    #allocation3 [shape = 'u8[2048]{0}', space=vmem, size = 0x800, scoped, tag = 'output window, operand 0']
    #allocation4 [shape = 's32[2]{0}', space=sflag, size = 0x8, scoped, tag = 'scoped memory for tpu_custom_call.1']
    %16 = vsyncpa [#allocation4], 0
    %s17 = scalar_lea.sflag [#allocation4], 1
    %18 = vsyncpa %s17, 0
    loop: start=0, step=1, limit=4
    $region2: #{tpu_custom_call.1} parent=1 // loop_pre_header
      _
    $region3: #{tpu_custom_call.1} parent=1 // loop_header
      %s20 = sphi 0, %s24
      %p21 = scmp.ge.s32.totalorder %s20, 4
      %s27 = sphi 0, %s39
      %s28 = sphi 0, %s35
      %s29 = sphi 0, %s27
      %s30 = sphi 0, %s28
      %s31 = sphi 0, %s29
      %s32 = sphi 0, %s30
      %s44 = sphi 0, %s46
      %s47 = sphi 0, %s44
      %s48 = sphi 0, %s47
      %s64 = sphi 0, %s48
      %s68 = sphi 0, %s68
      %s70 = sphi 0, %s68
      %s71 = sphi 0, %s70
      %s85 = sphi 0, %s71
      %s89 = sphi 0, %s89
      %s91 = sphi 0, %s89
      %s92 = sphi 0, %s91
      %s106 = sphi 0, %s92
      %s110 = sphi 0, %s110
      %s112 = sphi 0, %s110
      %s113 = sphi 0, %s112
      %s127 = sphi 0, %s113
      %s131 = sphi 0, %s131
      %s133 = sphi 0, %s131
      %s134 = sphi 0, %s133
      %s148 = sphi 0, %s134
      %s152 = sphi 0, %s152
      %s154 = sphi 0, %s152
      %s155 = sphi 0, %s154
      %s169 = sphi 0, %s155
      %s173 = sphi 0, %s173
      %s175 = sphi 0, %s173
      %s176 = sphi 0, %s175
      %s190 = sphi 0, %s176
      %s194 = sphi 0, %s194
      %s196 = sphi 0, %s194
      %s197 = sphi 0, %s196
      %s211 = sphi 0, %s197
      %s215 = sphi 0, %s215
      %s217 = sphi 0, %s215
      %s218 = sphi 0, %s217
      %s232 = sphi 0, %s218
      %s240 = sphi 0, %s242
      %s243 = sphi 0, %s240
      %s244 = sphi 0, %s243
      %s260 = sphi 0, %s244
    $region4: #{tpu_custom_call.1} parent=1 // loop_header_branch
      %23 = sbr.rel (%p21) target = $region8
    $region5: #{tpu_custom_call.1} parent=1 // loop_body
      %s25 = ssub.s32 %s20, 1
      %s26 = ssub.s32 %s20, 2
      %s33 = sadd.s32 1, %s28
      %p34 = scmp.ge.s32.totalorder %s33, 1
      %s35 = scalar_select %p34, 0, %s33
      %s36 = sadd.s32 1, %s27
      %s37 = scalar_select %p34, %s36, %s27
      %p38 = scmp.ge.s32.totalorder %s37, 2
      %s39 = scalar_select %p38, 0, %s37
      %s40 = ssub.s32 %s27, %s39
      %s41 = ssub.s32 %s28, %s35
      %s42 = sor.u32 %s40, %s41
      %p43 = scmp.eq.s32.totalorder %s42, 0
      %s45 = sadd.s32 %s44, 1
      %s46 = scalar_select %p43, %s44, %s45
      %p49 = pneg %p43
      %p50 = scmp.eq.s32.totalorder %s20, 1
      %p51 = por %p49, %p50
      %p52 = scmp.ne.s32.totalorder %s44, %s47
      %p53 = scmp.eq.s32.totalorder %s20, 0
      %p54 = por %p52, %p53
      %p55 = scmp.ne.s32.totalorder %s44, %s47
      %p56 = scmp.eq.s32.totalorder %s25, 1
      %p57 = por %p55, %p56
      %p58 = scmp.ne.s32.totalorder %s47, %s48
      %p59 = scmp.eq.s32.totalorder %s25, 0
      %p60 = por %p58, %p59
      %p61 = scmp.ne.s32.totalorder %s47, %s48
      %p62 = scmp.eq.s32.totalorder %s26, 1
      %p63 = por %p61, %p62
      %p65 = scmp.ne.s32.totalorder %s48, %s64
      %p66 = scmp.eq.s32.totalorder %s26, 0
      %p67 = por %p65, %p66
      %s69 = sadd.s32 %s68, 1
      %p72 = scmp.eq.s32.totalorder %s20, 1
      %p73 = scmp.ne.s32.totalorder %s68, %s70
      %p74 = scmp.eq.s32.totalorder %s20, 0
      %p75 = por %p73, %p74
      %p76 = scmp.ne.s32.totalorder %s68, %s70
      %p77 = scmp.eq.s32.totalorder %s25, 1
      %p78 = por %p76, %p77
      %p79 = scmp.ne.s32.totalorder %s70, %s71
      %p80 = scmp.eq.s32.totalorder %s25, 0
      %p81 = por %p79, %p80
      %p82 = scmp.ne.s32.totalorder %s70, %s71
      %p83 = scmp.eq.s32.totalorder %s26, 1
      %p84 = por %p82, %p83
      %p86 = scmp.ne.s32.totalorder %s71, %s85
      %p87 = scmp.eq.s32.totalorder %s26, 0
      %p88 = por %p86, %p87
      %s90 = sadd.s32 %s89, 1
      %p93 = scmp.eq.s32.totalorder %s20, 1
      %p94 = scmp.ne.s32.totalorder %s89, %s91
      %p95 = scmp.eq.s32.totalorder %s20, 0
      %p96 = por %p94, %p95
      %p97 = scmp.ne.s32.totalorder %s89, %s91
      %p98 = scmp.eq.s32.totalorder %s25, 1
      %p99 = por %p97, %p98
      %p100 = scmp.ne.s32.totalorder %s91, %s92
      %p101 = scmp.eq.s32.totalorder %s25, 0
      %p102 = por %p100, %p101
      %p103 = scmp.ne.s32.totalorder %s91, %s92
      %p104 = scmp.eq.s32.totalorder %s26, 1
      %p105 = por %p103, %p104
      %p107 = scmp.ne.s32.totalorder %s92, %s106
      %p108 = scmp.eq.s32.totalorder %s26, 0
      %p109 = por %p107, %p108
      %s111 = sadd.s32 %s110, 1
      %p114 = scmp.eq.s32.totalorder %s20, 1
      %p115 = scmp.ne.s32.totalorder %s110, %s112
      %p116 = scmp.eq.s32.totalorder %s20, 0
      %p117 = por %p115, %p116
      %p118 = scmp.ne.s32.totalorder %s110, %s112
      %p119 = scmp.eq.s32.totalorder %s25, 1
      %p120 = por %p118, %p119
      %p121 = scmp.ne.s32.totalorder %s112, %s113
      %p122 = scmp.eq.s32.totalorder %s25, 0
      %p123 = por %p121, %p122
      %p124 = scmp.ne.s32.totalorder %s112, %s113
      %p125 = scmp.eq.s32.totalorder %s26, 1
      %p126 = por %p124, %p125
      %p128 = scmp.ne.s32.totalorder %s113, %s127
      %p129 = scmp.eq.s32.totalorder %s26, 0
      %p130 = por %p128, %p129
      %s132 = sadd.s32 %s131, 1
      %p135 = scmp.eq.s32.totalorder %s20, 1
      %p136 = scmp.ne.s32.totalorder %s131, %s133
      %p137 = scmp.eq.s32.totalorder %s20, 0
      %p138 = por %p136, %p137
      %p139 = scmp.ne.s32.totalorder %s131, %s133
      %p140 = scmp.eq.s32.totalorder %s25, 1
      %p141 = por %p139, %p140
      %p142 = scmp.ne.s32.totalorder %s133, %s134
      %p143 = scmp.eq.s32.totalorder %s25, 0
      %p144 = por %p142, %p143
      %p145 = scmp.ne.s32.totalorder %s133, %s134
      %p146 = scmp.eq.s32.totalorder %s26, 1
      %p147 = por %p145, %p146
      %p149 = scmp.ne.s32.totalorder %s134, %s148
      %p150 = scmp.eq.s32.totalorder %s26, 0
      %p151 = por %p149, %p150
      %s153 = sadd.s32 %s152, 1
      %p156 = scmp.eq.s32.totalorder %s20, 1
      %p157 = scmp.ne.s32.totalorder %s152, %s154
      %p158 = scmp.eq.s32.totalorder %s20, 0
      %p159 = por %p157, %p158
      %p160 = scmp.ne.s32.totalorder %s152, %s154
      %p161 = scmp.eq.s32.totalorder %s25, 1
      %p162 = por %p160, %p161
      %p163 = scmp.ne.s32.totalorder %s154, %s155
      %p164 = scmp.eq.s32.totalorder %s25, 0
      %p165 = por %p163, %p164
      %p166 = scmp.ne.s32.totalorder %s154, %s155
      %p167 = scmp.eq.s32.totalorder %s26, 1
      %p168 = por %p166, %p167
      %p170 = scmp.ne.s32.totalorder %s155, %s169
      %p171 = scmp.eq.s32.totalorder %s26, 0
      %p172 = por %p170, %p171
      %s174 = sadd.s32 %s173, 1
      %p177 = scmp.eq.s32.totalorder %s20, 1
      %p178 = scmp.ne.s32.totalorder %s173, %s175
      %p179 = scmp.eq.s32.totalorder %s20, 0
      %p180 = por %p178, %p179
      %p181 = scmp.ne.s32.totalorder %s173, %s175
      %p182 = scmp.eq.s32.totalorder %s25, 1
      %p183 = por %p181, %p182
      %p184 = scmp.ne.s32.totalorder %s175, %s176
      %p185 = scmp.eq.s32.totalorder %s25, 0
      %p186 = por %p184, %p185
      %p187 = scmp.ne.s32.totalorder %s175, %s176
      %p188 = scmp.eq.s32.totalorder %s26, 1
      %p189 = por %p187, %p188
      %p191 = scmp.ne.s32.totalorder %s176, %s190
      %p192 = scmp.eq.s32.totalorder %s26, 0
      %p193 = por %p191, %p192
      %s195 = sadd.s32 %s194, 1
      %p198 = scmp.eq.s32.totalorder %s20, 1
      %p199 = scmp.ne.s32.totalorder %s194, %s196
      %p200 = scmp.eq.s32.totalorder %s20, 0
      %p201 = por %p199, %p200
      %p202 = scmp.ne.s32.totalorder %s194, %s196
      %p203 = scmp.eq.s32.totalorder %s25, 1
      %p204 = por %p202, %p203
      %p205 = scmp.ne.s32.totalorder %s196, %s197
      %p206 = scmp.eq.s32.totalorder %s25, 0
      %p207 = por %p205, %p206
      %p208 = scmp.ne.s32.totalorder %s196, %s197
      %p209 = scmp.eq.s32.totalorder %s26, 1
      %p210 = por %p208, %p209
      %p212 = scmp.ne.s32.totalorder %s197, %s211
      %p213 = scmp.eq.s32.totalorder %s26, 0
      %p214 = por %p212, %p213
      %s216 = sadd.s32 %s215, 1
      %p219 = scmp.eq.s32.totalorder %s20, 1
      %p220 = scmp.ne.s32.totalorder %s215, %s217
      %p221 = scmp.eq.s32.totalorder %s20, 0
      %p222 = por %p220, %p221
      %p223 = scmp.ne.s32.totalorder %s215, %s217
      %p224 = scmp.eq.s32.totalorder %s25, 1
      %p225 = por %p223, %p224
      %p226 = scmp.ne.s32.totalorder %s217, %s218
      %p227 = scmp.eq.s32.totalorder %s25, 0
      %p228 = por %p226, %p227
      %p229 = scmp.ne.s32.totalorder %s217, %s218
      %p230 = scmp.eq.s32.totalorder %s26, 1
      %p231 = por %p229, %p230
      %p233 = scmp.ne.s32.totalorder %s218, %s232
      %p234 = scmp.eq.s32.totalorder %s26, 0
      %p235 = por %p233, %p234
      %s236 = ssub.s32 %s27, %s39
      %s237 = ssub.s32 %s28, %s35
      %s238 = sor.u32 %s236, %s237
      %p239 = scmp.eq.s32.totalorder %s238, 0
      %s241 = sadd.s32 %s240, 1
      %s242 = scalar_select %p239, %s240, %s241
      %p245 = pneg %p239
      %p246 = scmp.eq.s32.totalorder %s20, 1
      %p247 = por %p245, %p246
      %p248 = scmp.ne.s32.totalorder %s240, %s243
      %p249 = scmp.eq.s32.totalorder %s20, 0
      %p250 = por %p248, %p249
      %p251 = scmp.ne.s32.totalorder %s240, %s243
      %p252 = scmp.eq.s32.totalorder %s25, 1
      %p253 = por %p251, %p252
      %p254 = scmp.ne.s32.totalorder %s243, %s244
      %p255 = scmp.eq.s32.totalorder %s25, 0
      %p256 = por %p254, %p255
      %p257 = scmp.ne.s32.totalorder %s243, %s244
      %p258 = scmp.eq.s32.totalorder %s26, 1
      %p259 = por %p257, %p258
      %p261 = scmp.ne.s32.totalorder %s244, %s260
      %p262 = scmp.eq.s32.totalorder %s26, 0
      %p263 = por %p261, %p262
      %p264 = scmp.le.s32.totalorder 1, %s20
      %p265 = scmp.lt.s32.totalorder %s20, 3
      %p266 = pnand %p264, %p265
      %p267 = pneg %p266
      // Predicated region
      $region9: #{tpu_custom_call.1} parent=5 // pred_check
        _
      $region10: #{tpu_custom_call.1} parent=5 // pred_check_branch
        %269 = sbr.rel (%p266) target = $region12
      $region11: #{tpu_custom_call.1} parent=5 // pred_region
        %s270 = ssub.s32 %s20, 1
        // Predicated region
        $region13: #{tpu_custom_call.1} parent=11 // pred_check
          %p271 = pneg %p81
        $region14: #{tpu_custom_call.1} parent=11 // pred_check_branch
          %273 = sbr.rel (%p271) target = $region16
        $region15: #{tpu_custom_call.1} parent=11 // pred_region
          _
        $region16: #{tpu_custom_call.1} parent=11 // pred_fallthru
          _
        // Predicated region
        $region17: #{tpu_custom_call.1} parent=11 // pred_check
          %p274 = pneg %p102
        $region18: #{tpu_custom_call.1} parent=11 // pred_check_branch
          %276 = sbr.rel (%p274) target = $region20
        $region19: #{tpu_custom_call.1} parent=11 // pred_region
          _
        $region20: #{tpu_custom_call.1} parent=11 // pred_fallthru
          _
        // Predicated region
        $region21: #{tpu_custom_call.1} parent=11 // pred_check
          %p277 = pneg %p123
        $region22: #{tpu_custom_call.1} parent=11 // pred_check_branch
          %279 = sbr.rel (%p277) target = $region24
        $region23: #{tpu_custom_call.1} parent=11 // pred_region
          _
        $region24: #{tpu_custom_call.1} parent=11 // pred_fallthru
          _
        // Predicated region
        $region25: #{tpu_custom_call.1} parent=11 // pred_check
          %p280 = pneg %p144
        $region26: #{tpu_custom_call.1} parent=11 // pred_check_branch
          %282 = sbr.rel (%p280) target = $region28
        $region27: #{tpu_custom_call.1} parent=11 // pred_region
          _
        $region28: #{tpu_custom_call.1} parent=11 // pred_fallthru
          _
        // Predicated region
        $region29: #{tpu_custom_call.1} parent=11 // pred_check
          %p283 = pneg %p165
        $region30: #{tpu_custom_call.1} parent=11 // pred_check_branch
          %285 = sbr.rel (%p283) target = $region32
        $region31: #{tpu_custom_call.1} parent=11 // pred_region
          _
        $region32: #{tpu_custom_call.1} parent=11 // pred_fallthru
          _
        // Predicated region
        $region33: #{tpu_custom_call.1} parent=11 // pred_check
          %p286 = pneg %p186
        $region34: #{tpu_custom_call.1} parent=11 // pred_check_branch
          %288 = sbr.rel (%p286) target = $region36
        $region35: #{tpu_custom_call.1} parent=11 // pred_region
          _
        $region36: #{tpu_custom_call.1} parent=11 // pred_fallthru
          _
        // Predicated region
        $region37: #{tpu_custom_call.1} parent=11 // pred_check
          %p289 = pneg %p207
        $region38: #{tpu_custom_call.1} parent=11 // pred_check_branch
          %291 = sbr.rel (%p289) target = $region40
        $region39: #{tpu_custom_call.1} parent=11 // pred_region
          _
        $region40: #{tpu_custom_call.1} parent=11 // pred_fallthru
          _
        // Predicated region
        $region41: #{tpu_custom_call.1} parent=11 // pred_check
          %p292 = pneg %p228
        $region42: #{tpu_custom_call.1} parent=11 // pred_check_branch
          %294 = sbr.rel (%p292) target = $region44
        $region43: #{tpu_custom_call.1} parent=11 // pred_region
          _
        $region44: #{tpu_custom_call.1} parent=11 // pred_fallthru
          _
      $region12: #{tpu_custom_call.1} parent=5 // pred_fallthru
        _
      %p295 = scmp.lt.s32.totalorder %s20, 2
      // Predicated region
      $region45: #{tpu_custom_call.1} parent=5 // pred_check
        %p296 = pneg %p295
      $region46: #{tpu_custom_call.1} parent=5 // pred_check_branch
        %298 = sbr.rel (%p296) target = $region48
      $region47: #{tpu_custom_call.1} parent=5 // pred_region
        // Predicated region
        $region49: #{tpu_custom_call.1} parent=47 // pred_check
          %p299 = pneg %p54
        $region50: #{tpu_custom_call.1} parent=47 // pred_check_branch
          %301 = sbr.rel (%p299) target = $region52
        $region51: #{tpu_custom_call.1} parent=47 // pred_region
          %s302 = smul.u32 2, %s28
          %p303 = scmp.lt.s32.totalorder %s27, 1
          %s304 = scalar_select %p303, %s27, 1
          %p305 = scmp.lt.s32.totalorder %s302, 1
          %s306 = scalar_select %p305, %s302, 1
          %s307 = smul.addr %s304, 2
          %s308 = sadd.s32 %s306, %s307
          %s309 = smul.addr %s308, 4
          %s310 = scalar_lea.vmem %s0, %s309
          %s311 = smul.u32 2, %s28
        $region52: #{tpu_custom_call.1} parent=47 // pred_fallthru
          _
      $region48: #{tpu_custom_call.1} parent=5 // pred_fallthru
        _
      %p312 = scmp.le.s32.totalorder 1, %s20
      %p313 = scmp.lt.s32.totalorder %s20, 3
      %p314 = pnand %p312, %p313
      %p315 = pneg %p314
      // Predicated region
      $region53: #{tpu_custom_call.1} parent=5 // pred_check
        _
      $region54: #{tpu_custom_call.1} parent=5 // pred_check_branch
        %317 = sbr.rel (%p314) target = $region56
      $region55: #{tpu_custom_call.1} parent=5 // pred_region
        %s318 = ssub.s32 %s20, 1
        %s319 = smul.u32 2, %s30
        %p320 = scmp.lt.s32.totalorder %s29, 1
        %s321 = scalar_select %p320, %s29, 1
        %p322 = scmp.lt.s32.totalorder %s319, 1
        %s323 = scalar_select %p322, %s319, 1
        %s324 = smul.addr %s321, 2
        %s325 = sadd.s32 %s323, %s324
        %s326 = smul.addr %s325, 4
        %s327 = scalar_lea.vmem %s0, %s326
        %p328 = pneg %p60
        %p329 = pneg %p57
        %p330 = pneg %p81
        %p331 = pneg %p78
        %p332 = pneg %p102
        %p333 = pneg %p99
        %p334 = pneg %p123
        %p335 = pneg %p120
        %p336 = pneg %p144
        %p337 = pneg %p141
        %p338 = pneg %p165
        %p339 = pneg %p162
        %p340 = pneg %p186
        %p341 = pneg %p183
        %p342 = pneg %p207
        %p343 = pneg %p204
        %p344 = pneg %p228
        %p345 = pneg %p225
        %p346 = pneg %p256
        %p347 = pneg %p253
        %s348 = sand.u32 %s243, 1
        %s349 = scalar_lea.sflag [#allocation4], %s348
        %s350 = sand.u32 %s243, 1
        %s351 = smul.addr %s350, 2
        %s352 = scalar_lea.vmem [#allocation3], %s351
        %s353 = smul.u32 2, %s30
        %p354 = scmp.lt.s32.totalorder %s29, 1
        %s355 = scalar_select %p354, %s29, 1
        %p356 = scmp.lt.s32.totalorder %s353, 1
        %s357 = scalar_select %p356, %s353, 1
        %s358 = smul.addr %s355, 2
        %s359 = sadd.s32 %s357, %s358
        %s360 = smul.addr %s359, 4
        %s361 = scalar_lea.vmem %s0, %s360
        %s362 = smul.u32 2, %s30
        %s363 = smul.u32 2, %s30
        %v364 = vld [vmem:[%s361] sm:$0xff]
        %v365 = vmul.f32 %v364, 0.003921569
        %v366 = vsub.f32 %v365, 0.5
        %v367 = vld [vmem:[%s1] sm:$0xff]
        %v368 = vld [vmem:[%s1 + $0x8] sm:$0xff]
        %v369 = vld [vmem:[%s1 + $0x10] sm:$0xff]
        %v370 = vld [vmem:[%s1 + $0x18] sm:$0xff]
        %v371 = vld [vmem:[%s2] sm:$0xff]
        %v372 = vld [vmem:[%s2 + $0x8] sm:$0xff]
        %v373 = vld [vmem:[%s2 + $0x10] sm:$0xff]
        %v374 = vld [vmem:[%s2 + $0x18] sm:$0xff]
        %376 = vset.pattern.permute.xlu0 0
        %377 = vperm.xlu0 %376, %v371
        %v378 = vpop.permute.xlu0 %377
        %381 = vset.pattern.permute.xlu0 0
        %382 = vperm.xlu0 %381, %v372
        %v383 = vpop.permute.xlu0 %382
        %386 = vset.pattern.permute.xlu0 0
        %387 = vperm.xlu0 %386, %v373
        %v388 = vpop.permute.xlu0 %387
        %391 = vset.pattern.permute.xlu0 0
        %392 = vperm.xlu0 %391, %v374
        %v393 = vpop.permute.xlu0 %392
        %396 = vst [vmem:[#allocation1] ss:$2 sm:$0xff] %v366
        %v397 = vld.sshfl [vmem:[#allocation1] sm:$0xff pattern:$0x75316420]
        %v398 = vld.sshfl [vmem:[#allocation1 + $0x8] sm:$0xff pattern:$0x75316420]
        %vm399 = vcmask 31744
        %v401 = vsel %vm399, %v367, 0
        %v404 = vsel %vm399, %v368, 0
        %v407 = vsel %vm399, %v369, 0
        %v410 = vsel %vm399, %v370, 0
        %vm412 = vcmask 1043456
        %v413 = vsel %vm412, %v397, 0
        %v415 = vsel %vm412, %v398, 0
        %417 = vmatpush.msra.mxu0 0.0
        %418 = vmatpush.msra.mxu0 0.0
        %419 = vmatpush.msra.mxu0 0.0
        %420 = vmatpush.msra.mxu0 0.0
        %421 = vmatpush.msra.mxu0 0.0
        %422 = vmatpush.msra.mxu0 0.0
        %423 = vmatpush.msra.mxu0 0.0
        %424 = vmatpush.msra.mxu0 0.0
        %425 = vmatpush.msra.mxu0 0.0
        %426 = vmatpush.msra.mxu0 0.0
        %427 = vmatpush.msra.mxu0 0.0
        %428 = vmatpush.msra.mxu0 0.0
        %429 = vmatpush.msra.mxu0 0.0
        %430 = vmatpush.msra.mxu0 0.0
        %431 = vmatpush.msra.mxu0 0.0
        %432 = vmatpush.msra.mxu0 %v413
        %433 = vmatmul.f32.gmra.mxu0 %v401
        %v434 = vpop.f32.mrf.mxu0
        %v435 = vadd.f32 %v378, %v434
        %436 = vmatmul.f32.gmra.mxu0 %v404
        %v437 = vpop.f32.mrf.mxu0
        %v438 = vadd.f32 %v383, %v437
        %439 = vmatmul.f32.gmra.mxu0 %v407
        %v440 = vpop.f32.mrf.mxu0
        %v441 = vadd.f32 %v388, %v440
        %442 = vmatmul.f32.gmra.mxu0 %v410
        %v443 = vpop.f32.mrf.mxu0
        %v444 = vadd.f32 %v393, %v443
        %445 = vdwg.mxu0
        %446 = vmatpush.msra.mxu0 0.0
        %447 = vmatpush.msra.mxu0 0.0
        %448 = vmatpush.msra.mxu0 0.0
        %449 = vmatpush.msra.mxu0 0.0
        %450 = vmatpush.msra.mxu0 0.0
        %451 = vmatpush.msra.mxu0 0.0
        %452 = vmatpush.msra.mxu0 0.0
        %453 = vmatpush.msra.mxu0 0.0
        %454 = vmatpush.msra.mxu0 0.0
        %455 = vmatpush.msra.mxu0 0.0
        %456 = vmatpush.msra.mxu0 0.0
        %457 = vmatpush.msra.mxu0 0.0
        %458 = vmatpush.msra.mxu0 0.0
        %459 = vmatpush.msra.mxu0 0.0
        %460 = vmatpush.msra.mxu0 0.0
        %461 = vmatpush.msra.mxu0 %v415
        %462 = vmatmul.f32.gmra.mxu0 %v401
        %v463 = vpop.f32.mrf.mxu0
        %v464 = vadd.f32 %v378, %v463
        %465 = vmatmul.f32.gmra.mxu0 %v404
        %v466 = vpop.f32.mrf.mxu0
        %v467 = vadd.f32 %v383, %v466
        %468 = vmatmul.f32.gmra.mxu0 %v407
        %v469 = vpop.f32.mrf.mxu0
        %v470 = vadd.f32 %v388, %v469
        %471 = vmatmul.f32.gmra.mxu0 %v410
        %v472 = vpop.f32.mrf.mxu0
        %v473 = vadd.f32 %v393, %v472
        %474 = vdwg.mxu0
        %vm475 = vcmp.gt.f32.partialorder %v435, 0.0
        %vm476 = vcmp.gt.f32.partialorder %v464, 0.0
        %vm477 = vcmp.gt.f32.partialorder %v438, 0.0
        %vm478 = vcmp.gt.f32.partialorder %v467, 0.0
        %vm479 = vcmp.gt.f32.partialorder %v441, 0.0
        %vm480 = vcmp.gt.f32.partialorder %v470, 0.0
        %vm481 = vcmp.gt.f32.partialorder %v444, 0.0
        %vm482 = vcmp.gt.f32.partialorder %v473, 0.0
        %v483 = vmul.f32 %v435, 0.2
        %v484 = vmul.f32 %v464, 0.2
        %v485 = vmul.f32 %v438, 0.2
        %v486 = vmul.f32 %v467, 0.2
        %v487 = vmul.f32 %v441, 0.2
        %v488 = vmul.f32 %v470, 0.2
        %v489 = vmul.f32 %v444, 0.2
        %v490 = vmul.f32 %v473, 0.2
        %v491 = vsel %vm475, %v435, %v483
        %v492 = vsel %vm476, %v464, %v484
        %v493 = vsel %vm477, %v438, %v485
        %v494 = vsel %vm478, %v467, %v486
        %v495 = vsel %vm479, %v441, %v487
        %v496 = vsel %vm480, %v470, %v488
        %v497 = vsel %vm481, %v444, %v489
        %v498 = vsel %vm482, %v473, %v490
        %v499 = vld [vmem:[%s3] sm:$0xff]
        %v500 = vld [vmem:[%s3 + $0x8] sm:$0xff]
        %v501 = vld [vmem:[%s3 + $0x10] sm:$0xff]
        %v502 = vld [vmem:[%s3 + $0x18] sm:$0xff]
        %v503 = vld [vmem:[%s3 + $0x20] sm:$0xff]
        %v504 = vld [vmem:[%s3 + $0x28] sm:$0xff]
        %v505 = vld [vmem:[%s3 + $0x30] sm:$0xff]
        %v506 = vld [vmem:[%s3 + $0x38] sm:$0xff]
        %v507 = vld [vmem:[%s4] sm:$0xff]
        %v508 = vld [vmem:[%s4 + $0x8] sm:$0xff]
        %v509 = vld [vmem:[%s4 + $0x10] sm:$0xff]
        %v510 = vld [vmem:[%s4 + $0x18] sm:$0xff]
        %v511 = vld [vmem:[%s4 + $0x20] sm:$0xff]
        %v512 = vld [vmem:[%s4 + $0x28] sm:$0xff]
        %v513 = vld [vmem:[%s4 + $0x30] sm:$0xff]
        %v514 = vld [vmem:[%s4 + $0x38] sm:$0xff]
        %516 = vset.pattern.permute.xlu0 0
        %517 = vperm.xlu0 %516, %v507
        %v518 = vpop.permute.xlu0 %517
        %521 = vset.pattern.permute.xlu0 0
        %522 = vperm.xlu0 %521, %v508
        %v523 = vpop.permute.xlu0 %522
        %526 = vset.pattern.permute.xlu0 0
        %527 = vperm.xlu0 %526, %v509
        %v528 = vpop.permute.xlu0 %527
        %531 = vset.pattern.permute.xlu0 0
        %532 = vperm.xlu0 %531, %v510
        %v533 = vpop.permute.xlu0 %532
        %536 = vset.pattern.permute.xlu0 0
        %537 = vperm.xlu0 %536, %v511
        %v538 = vpop.permute.xlu0 %537
        %541 = vset.pattern.permute.xlu0 0
        %542 = vperm.xlu0 %541, %v512
        %v543 = vpop.permute.xlu0 %542
        %546 = vset.pattern.permute.xlu0 0
        %547 = vperm.xlu0 %546, %v513
        %v548 = vpop.permute.xlu0 %547
        %551 = vset.pattern.permute.xlu0 0
        %552 = vperm.xlu0 %551, %v514
        %v553 = vpop.permute.xlu0 %552
        %vm555 = vcmask 261120
        %v557 = vsel %vm555, %v499, 0
        %v560 = vsel %vm555, %v500, 0
        %v563 = vsel %vm555, %v501, 0
        %v566 = vsel %vm555, %v502, 0
        %v569 = vsel %vm555, %v503, 0
        %v572 = vsel %vm555, %v504, 0
        %v575 = vsel %vm555, %v505, 0
        %v578 = vsel %vm555, %v506, 0
        %580 = vmatpush.msra.mxu0 0.0
        %581 = vmatpush.msra.mxu0 0.0
        %582 = vmatpush.msra.mxu0 0.0
        %583 = vmatpush.msra.mxu0 0.0
        %584 = vmatpush.msra.mxu0 0.0
        %585 = vmatpush.msra.mxu0 0.0
        %586 = vmatpush.msra.mxu0 0.0
        %587 = vmatpush.msra.mxu0 0.0
        %588 = vmatpush.msra.mxu0 0.0
        %589 = vmatpush.msra.mxu0 0.0
        %590 = vmatpush.msra.mxu0 0.0
        %591 = vmatpush.msra.mxu0 0.0
        %592 = vmatpush.msra.mxu0 %v497
        %593 = vmatpush.msra.mxu0 %v495
        %594 = vmatpush.msra.mxu0 %v493
        %595 = vmatpush.msra.mxu0 %v491
        %596 = vmatmul.f32.gmra.mxu0 %v557
        %v597 = vpop.f32.mrf.mxu0
        %v598 = vadd.f32 %v518, %v597
        %599 = vmatmul.f32.gmra.mxu0 %v560
        %v600 = vpop.f32.mrf.mxu0
        %v601 = vadd.f32 %v523, %v600
        %602 = vmatmul.f32.gmra.mxu0 %v563
        %v603 = vpop.f32.mrf.mxu0
        %v604 = vadd.f32 %v528, %v603
        %605 = vmatmul.f32.gmra.mxu0 %v566
        %v606 = vpop.f32.mrf.mxu0
        %v607 = vadd.f32 %v533, %v606
        %608 = vmatmul.f32.gmra.mxu0 %v569
        %v609 = vpop.f32.mrf.mxu0
        %v610 = vadd.f32 %v538, %v609
        %611 = vmatmul.f32.gmra.mxu0 %v572
        %v612 = vpop.f32.mrf.mxu0
        %v613 = vadd.f32 %v543, %v612
        %614 = vmatmul.f32.gmra.mxu0 %v575
        %v615 = vpop.f32.mrf.mxu0
        %v616 = vadd.f32 %v548, %v615
        %617 = vmatmul.f32.gmra.mxu0 %v578
        %v618 = vpop.f32.mrf.mxu0
        %v619 = vadd.f32 %v553, %v618
        %620 = vdwg.mxu0
        %621 = vmatpush.msra.mxu0 0.0
        %622 = vmatpush.msra.mxu0 0.0
        %623 = vmatpush.msra.mxu0 0.0
        %624 = vmatpush.msra.mxu0 0.0
        %625 = vmatpush.msra.mxu0 0.0
        %626 = vmatpush.msra.mxu0 0.0
        %627 = vmatpush.msra.mxu0 0.0
        %628 = vmatpush.msra.mxu0 0.0
        %629 = vmatpush.msra.mxu0 0.0
        %630 = vmatpush.msra.mxu0 0.0
        %631 = vmatpush.msra.mxu0 0.0
        %632 = vmatpush.msra.mxu0 0.0
        %633 = vmatpush.msra.mxu0 %v498
        %634 = vmatpush.msra.mxu0 %v496
        %635 = vmatpush.msra.mxu0 %v494
        %636 = vmatpush.msra.mxu0 %v492
        %637 = vmatmul.f32.gmra.mxu0 %v557
        %v638 = vpop.f32.mrf.mxu0
        %v639 = vadd.f32 %v518, %v638
        %640 = vmatmul.f32.gmra.mxu0 %v560
        %v641 = vpop.f32.mrf.mxu0
        %v642 = vadd.f32 %v523, %v641
        %643 = vmatmul.f32.gmra.mxu0 %v563
        %v644 = vpop.f32.mrf.mxu0
        %v645 = vadd.f32 %v528, %v644
        %646 = vmatmul.f32.gmra.mxu0 %v566
        %v647 = vpop.f32.mrf.mxu0
        %v648 = vadd.f32 %v533, %v647
        %649 = vmatmul.f32.gmra.mxu0 %v569
        %v650 = vpop.f32.mrf.mxu0
        %v651 = vadd.f32 %v538, %v650
        %652 = vmatmul.f32.gmra.mxu0 %v572
        %v653 = vpop.f32.mrf.mxu0
        %v654 = vadd.f32 %v543, %v653
        %655 = vmatmul.f32.gmra.mxu0 %v575
        %v656 = vpop.f32.mrf.mxu0
        %v657 = vadd.f32 %v548, %v656
        %658 = vmatmul.f32.gmra.mxu0 %v578
        %v659 = vpop.f32.mrf.mxu0
        %v660 = vadd.f32 %v553, %v659
        %661 = vdwg.mxu0
        %vm662 = vcmp.gt.f32.partialorder %v598, 0.0
        %vm663 = vcmp.gt.f32.partialorder %v639, 0.0
        %vm664 = vcmp.gt.f32.partialorder %v601, 0.0
        %vm665 = vcmp.gt.f32.partialorder %v642, 0.0
        %vm666 = vcmp.gt.f32.partialorder %v604, 0.0
        %vm667 = vcmp.gt.f32.partialorder %v645, 0.0
        %vm668 = vcmp.gt.f32.partialorder %v607, 0.0
        %vm669 = vcmp.gt.f32.partialorder %v648, 0.0
        %vm670 = vcmp.gt.f32.partialorder %v610, 0.0
        %vm671 = vcmp.gt.f32.partialorder %v651, 0.0
        %vm672 = vcmp.gt.f32.partialorder %v613, 0.0
        %vm673 = vcmp.gt.f32.partialorder %v654, 0.0
        %vm674 = vcmp.gt.f32.partialorder %v616, 0.0
        %vm675 = vcmp.gt.f32.partialorder %v657, 0.0
        %vm676 = vcmp.gt.f32.partialorder %v619, 0.0
        %vm677 = vcmp.gt.f32.partialorder %v660, 0.0
        %v678 = vmul.f32 %v598, 0.2
        %v679 = vmul.f32 %v639, 0.2
        %v680 = vmul.f32 %v601, 0.2
        %v681 = vmul.f32 %v642, 0.2
        %v682 = vmul.f32 %v604, 0.2
        %v683 = vmul.f32 %v645, 0.2
        %v684 = vmul.f32 %v607, 0.2
        %v685 = vmul.f32 %v648, 0.2
        %v686 = vmul.f32 %v610, 0.2
        %v687 = vmul.f32 %v651, 0.2
        %v688 = vmul.f32 %v613, 0.2
        %v689 = vmul.f32 %v654, 0.2
        %v690 = vmul.f32 %v616, 0.2
        %v691 = vmul.f32 %v657, 0.2
        %v692 = vmul.f32 %v619, 0.2
        %v693 = vmul.f32 %v660, 0.2
        %v694 = vsel %vm662, %v598, %v678
        %v695 = vsel %vm663, %v639, %v679
        %v696 = vsel %vm664, %v601, %v680
        %v697 = vsel %vm665, %v642, %v681
        %v698 = vsel %vm666, %v604, %v682
        %v699 = vsel %vm667, %v645, %v683
        %v700 = vsel %vm668, %v607, %v684
        %v701 = vsel %vm669, %v648, %v685
        %v702 = vsel %vm670, %v610, %v686
        %v703 = vsel %vm671, %v651, %v687
        %v704 = vsel %vm672, %v613, %v688
        %v705 = vsel %vm673, %v654, %v689
        %v706 = vsel %vm674, %v616, %v690
        %v707 = vsel %vm675, %v657, %v691
        %v708 = vsel %vm676, %v619, %v692
        %v709 = vsel %vm677, %v660, %v693
        %v710 = vld [vmem:[%s5] sm:$0xff]
        %v711 = vld [vmem:[%s5 + $0x8] sm:$0xff]
        %v712 = vld [vmem:[%s5 + $0x10] sm:$0xff]
        %v713 = vld [vmem:[%s5 + $0x18] sm:$0xff]
        %v714 = vld [vmem:[%s5 + $0x20] sm:$0xff]
        %v715 = vld [vmem:[%s5 + $0x28] sm:$0xff]
        %v716 = vld [vmem:[%s5 + $0x30] sm:$0xff]
        %v717 = vld [vmem:[%s5 + $0x38] sm:$0xff]
        %v718 = vld [vmem:[%s5 + $0x40] sm:$0xff]
        %v719 = vld [vmem:[%s5 + $0x48] sm:$0xff]
        %v720 = vld [vmem:[%s5 + $0x50] sm:$0xff]
        %v721 = vld [vmem:[%s5 + $0x58] sm:$0xff]
        %v722 = vld [vmem:[%s5 + $0x60] sm:$0xff]
        %v723 = vld [vmem:[%s5 + $0x68] sm:$0xff]
        %v724 = vld [vmem:[%s5 + $0x70] sm:$0xff]
        %v725 = vld [vmem:[%s5 + $0x78] sm:$0xff]
        %v726 = vld [vmem:[%s6] sm:$0xff]
        %v727 = vld [vmem:[%s6 + $0x8] sm:$0xff]
        %v728 = vld [vmem:[%s6 + $0x10] sm:$0xff]
        %v729 = vld [vmem:[%s6 + $0x18] sm:$0xff]
        %v730 = vld [vmem:[%s6 + $0x20] sm:$0xff]
        %v731 = vld [vmem:[%s6 + $0x28] sm:$0xff]
        %v732 = vld [vmem:[%s6 + $0x30] sm:$0xff]
        %v733 = vld [vmem:[%s6 + $0x38] sm:$0xff]
        %v734 = vld [vmem:[%s6 + $0x40] sm:$0xff]
        %v735 = vld [vmem:[%s6 + $0x48] sm:$0xff]
        %v736 = vld [vmem:[%s6 + $0x50] sm:$0xff]
        %v737 = vld [vmem:[%s6 + $0x58] sm:$0xff]
        %v738 = vld [vmem:[%s6 + $0x60] sm:$0xff]
        %v739 = vld [vmem:[%s6 + $0x68] sm:$0xff]
        %v740 = vld [vmem:[%s6 + $0x70] sm:$0xff]
        %v741 = vld [vmem:[%s6 + $0x78] sm:$0xff]
        %743 = vset.pattern.permute.xlu0 0
        %744 = vperm.xlu0 %743, %v726
        %v745 = vpop.permute.xlu0 %744
        %748 = vset.pattern.permute.xlu0 0
        %749 = vperm.xlu0 %748, %v727
        %v750 = vpop.permute.xlu0 %749
        %753 = vset.pattern.permute.xlu0 0
        %754 = vperm.xlu0 %753, %v728
        %v755 = vpop.permute.xlu0 %754
        %758 = vset.pattern.permute.xlu0 0
        %759 = vperm.xlu0 %758, %v729
        %v760 = vpop.permute.xlu0 %759
        %763 = vset.pattern.permute.xlu0 0
        %764 = vperm.xlu0 %763, %v730
        %v765 = vpop.permute.xlu0 %764
        %768 = vset.pattern.permute.xlu0 0
        %769 = vperm.xlu0 %768, %v731
        %v770 = vpop.permute.xlu0 %769
        %773 = vset.pattern.permute.xlu0 0
        %774 = vperm.xlu0 %773, %v732
        %v775 = vpop.permute.xlu0 %774
        %778 = vset.pattern.permute.xlu0 0
        %779 = vperm.xlu0 %778, %v733
        %v780 = vpop.permute.xlu0 %779
        %783 = vset.pattern.permute.xlu0 0
        %784 = vperm.xlu0 %783, %v734
        %v785 = vpop.permute.xlu0 %784
        %788 = vset.pattern.permute.xlu0 0
        %789 = vperm.xlu0 %788, %v735
        %v790 = vpop.permute.xlu0 %789
        %793 = vset.pattern.permute.xlu0 0
        %794 = vperm.xlu0 %793, %v736
        %v795 = vpop.permute.xlu0 %794
        %798 = vset.pattern.permute.xlu0 0
        %799 = vperm.xlu0 %798, %v737
        %v800 = vpop.permute.xlu0 %799
        %803 = vset.pattern.permute.xlu0 0
        %804 = vperm.xlu0 %803, %v738
        %v805 = vpop.permute.xlu0 %804
        %808 = vset.pattern.permute.xlu0 0
        %809 = vperm.xlu0 %808, %v739
        %v810 = vpop.permute.xlu0 %809
        %813 = vset.pattern.permute.xlu0 0
        %814 = vperm.xlu0 %813, %v740
        %v815 = vpop.permute.xlu0 %814
        %818 = vset.pattern.permute.xlu0 0
        %819 = vperm.xlu0 %818, %v741
        %v820 = vpop.permute.xlu0 %819
        %vm822 = vcmask 523264
        %v824 = vsel %vm822, %v710, 0
        %v827 = vsel %vm822, %v711, 0
        %v830 = vsel %vm822, %v712, 0
        %v833 = vsel %vm822, %v713, 0
        %v836 = vsel %vm822, %v714, 0
        %v839 = vsel %vm822, %v715, 0
        %v842 = vsel %vm822, %v716, 0
        %v845 = vsel %vm822, %v717, 0
        %v848 = vsel %vm822, %v718, 0
        %v851 = vsel %vm822, %v719, 0
        %v854 = vsel %vm822, %v720, 0
        %v857 = vsel %vm822, %v721, 0
        %v860 = vsel %vm822, %v722, 0
        %v863 = vsel %vm822, %v723, 0
        %v866 = vsel %vm822, %v724, 0
        %v869 = vsel %vm822, %v725, 0
        %871 = vmatpush.msra.mxu0 0.0
        %872 = vmatpush.msra.mxu0 0.0
        %873 = vmatpush.msra.mxu0 0.0
        %874 = vmatpush.msra.mxu0 0.0
        %875 = vmatpush.msra.mxu0 0.0
        %876 = vmatpush.msra.mxu0 0.0
        %877 = vmatpush.msra.mxu0 0.0
        %878 = vmatpush.msra.mxu0 0.0
        %879 = vmatpush.msra.mxu0 %v708
        %880 = vmatpush.msra.mxu0 %v706
        %881 = vmatpush.msra.mxu0 %v704
        %882 = vmatpush.msra.mxu0 %v702
        %883 = vmatpush.msra.mxu0 %v700
        %884 = vmatpush.msra.mxu0 %v698
        %885 = vmatpush.msra.mxu0 %v696
        %886 = vmatpush.msra.mxu0 %v694
        %887 = vmatmul.f32.gmra.mxu0 %v824
        %v888 = vpop.f32.mrf.mxu0
        %v889 = vadd.f32 %v745, %v888
        %890 = vmatmul.f32.gmra.mxu0 %v827
        %v891 = vpop.f32.mrf.mxu0
        %v892 = vadd.f32 %v750, %v891
        %893 = vmatmul.f32.gmra.mxu0 %v830
        %v894 = vpop.f32.mrf.mxu0
        %v895 = vadd.f32 %v755, %v894
        %896 = vmatmul.f32.gmra.mxu0 %v833
        %v897 = vpop.f32.mrf.mxu0
        %v898 = vadd.f32 %v760, %v897
        %899 = vmatmul.f32.gmra.mxu0 %v836
        %v900 = vpop.f32.mrf.mxu0
        %v901 = vadd.f32 %v765, %v900
        %902 = vmatmul.f32.gmra.mxu0 %v839
        %v903 = vpop.f32.mrf.mxu0
        %v904 = vadd.f32 %v770, %v903
        %905 = vmatmul.f32.gmra.mxu0 %v842
        %v906 = vpop.f32.mrf.mxu0
        %v907 = vadd.f32 %v775, %v906
        %908 = vmatmul.f32.gmra.mxu0 %v845
        %v909 = vpop.f32.mrf.mxu0
        %v910 = vadd.f32 %v780, %v909
        %911 = vmatmul.f32.gmra.mxu0 %v848
        %v912 = vpop.f32.mrf.mxu0
        %v913 = vadd.f32 %v785, %v912
        %914 = vmatmul.f32.gmra.mxu0 %v851
        %v915 = vpop.f32.mrf.mxu0
        %v916 = vadd.f32 %v790, %v915
        %917 = vmatmul.f32.gmra.mxu0 %v854
        %v918 = vpop.f32.mrf.mxu0
        %v919 = vadd.f32 %v795, %v918
        %920 = vmatmul.f32.gmra.mxu0 %v857
        %v921 = vpop.f32.mrf.mxu0
        %v922 = vadd.f32 %v800, %v921
        %923 = vmatmul.f32.gmra.mxu0 %v860
        %v924 = vpop.f32.mrf.mxu0
        %v925 = vadd.f32 %v805, %v924
        %926 = vmatmul.f32.gmra.mxu0 %v863
        %v927 = vpop.f32.mrf.mxu0
        %v928 = vadd.f32 %v810, %v927
        %929 = vmatmul.f32.gmra.mxu0 %v866
        %v930 = vpop.f32.mrf.mxu0
        %v931 = vadd.f32 %v815, %v930
        %932 = vmatmul.f32.gmra.mxu0 %v869
        %v933 = vpop.f32.mrf.mxu0
        %v934 = vadd.f32 %v820, %v933
        %935 = vdwg.mxu0
        %936 = vmatpush.msra.mxu0 0.0
        %937 = vmatpush.msra.mxu0 0.0
        %938 = vmatpush.msra.mxu0 0.0
        %939 = vmatpush.msra.mxu0 0.0
        %940 = vmatpush.msra.mxu0 0.0
        %941 = vmatpush.msra.mxu0 0.0
        %942 = vmatpush.msra.mxu0 0.0
        %943 = vmatpush.msra.mxu0 0.0
        %944 = vmatpush.msra.mxu0 %v709
        %945 = vmatpush.msra.mxu0 %v707
        %946 = vmatpush.msra.mxu0 %v705
        %947 = vmatpush.msra.mxu0 %v703
        %948 = vmatpush.msra.mxu0 %v701
        %949 = vmatpush.msra.mxu0 %v699
        %950 = vmatpush.msra.mxu0 %v697
        %951 = vmatpush.msra.mxu0 %v695
        %952 = vmatmul.f32.gmra.mxu0 %v824
        %v953 = vpop.f32.mrf.mxu0
        %v954 = vadd.f32 %v745, %v953
        %955 = vmatmul.f32.gmra.mxu0 %v827
        %v956 = vpop.f32.mrf.mxu0
        %v957 = vadd.f32 %v750, %v956
        %958 = vmatmul.f32.gmra.mxu0 %v830
        %v959 = vpop.f32.mrf.mxu0
        %v960 = vadd.f32 %v755, %v959
        %961 = vmatmul.f32.gmra.mxu0 %v833
        %v962 = vpop.f32.mrf.mxu0
        %v963 = vadd.f32 %v760, %v962
        %964 = vmatmul.f32.gmra.mxu0 %v836
        %v965 = vpop.f32.mrf.mxu0
        %v966 = vadd.f32 %v765, %v965
        %967 = vmatmul.f32.gmra.mxu0 %v839
        %v968 = vpop.f32.mrf.mxu0
        %v969 = vadd.f32 %v770, %v968
        %970 = vmatmul.f32.gmra.mxu0 %v842
        %v971 = vpop.f32.mrf.mxu0
        %v972 = vadd.f32 %v775, %v971
        %973 = vmatmul.f32.gmra.mxu0 %v845
        %v974 = vpop.f32.mrf.mxu0
        %v975 = vadd.f32 %v780, %v974
        %976 = vmatmul.f32.gmra.mxu0 %v848
        %v977 = vpop.f32.mrf.mxu0
        %v978 = vadd.f32 %v785, %v977
        %979 = vmatmul.f32.gmra.mxu0 %v851
        %v980 = vpop.f32.mrf.mxu0
        %v981 = vadd.f32 %v790, %v980
        %982 = vmatmul.f32.gmra.mxu0 %v854
        %v983 = vpop.f32.mrf.mxu0
        %v984 = vadd.f32 %v795, %v983
        %985 = vmatmul.f32.gmra.mxu0 %v857
        %v986 = vpop.f32.mrf.mxu0
        %v987 = vadd.f32 %v800, %v986
        %988 = vmatmul.f32.gmra.mxu0 %v860
        %v989 = vpop.f32.mrf.mxu0
        %v990 = vadd.f32 %v805, %v989
        %991 = vmatmul.f32.gmra.mxu0 %v863
        %v992 = vpop.f32.mrf.mxu0
        %v993 = vadd.f32 %v810, %v992
        %994 = vmatmul.f32.gmra.mxu0 %v866
        %v995 = vpop.f32.mrf.mxu0
        %v996 = vadd.f32 %v815, %v995
        %997 = vmatmul.f32.gmra.mxu0 %v869
        %v998 = vpop.f32.mrf.mxu0
        %v999 = vadd.f32 %v820, %v998
        %1000 = vdwg.mxu0
        %vm1001 = vcmp.gt.f32.partialorder %v889, 0.0
        %vm1002 = vcmp.gt.f32.partialorder %v954, 0.0
        %vm1003 = vcmp.gt.f32.partialorder %v892, 0.0
        %vm1004 = vcmp.gt.f32.partialorder %v957, 0.0
        %vm1005 = vcmp.gt.f32.partialorder %v895, 0.0
        %vm1006 = vcmp.gt.f32.partialorder %v960, 0.0
        %vm1007 = vcmp.gt.f32.partialorder %v898, 0.0
        %vm1008 = vcmp.gt.f32.partialorder %v963, 0.0
        %vm1009 = vcmp.gt.f32.partialorder %v901, 0.0
        %vm1010 = vcmp.gt.f32.partialorder %v966, 0.0
        %vm1011 = vcmp.gt.f32.partialorder %v904, 0.0
        %vm1012 = vcmp.gt.f32.partialorder %v969, 0.0
        %vm1013 = vcmp.gt.f32.partialorder %v907, 0.0
        %vm1014 = vcmp.gt.f32.partialorder %v972, 0.0
        %vm1015 = vcmp.gt.f32.partialorder %v910, 0.0
        %vm1016 = vcmp.gt.f32.partialorder %v975, 0.0
        %vm1017 = vcmp.gt.f32.partialorder %v913, 0.0
        %vm1018 = vcmp.gt.f32.partialorder %v978, 0.0
        %vm1019 = vcmp.gt.f32.partialorder %v916, 0.0
        %vm1020 = vcmp.gt.f32.partialorder %v981, 0.0
        %vm1021 = vcmp.gt.f32.partialorder %v919, 0.0
        %vm1022 = vcmp.gt.f32.partialorder %v984, 0.0
        %vm1023 = vcmp.gt.f32.partialorder %v922, 0.0
        %vm1024 = vcmp.gt.f32.partialorder %v987, 0.0
        %vm1025 = vcmp.gt.f32.partialorder %v925, 0.0
        %vm1026 = vcmp.gt.f32.partialorder %v990, 0.0
        %vm1027 = vcmp.gt.f32.partialorder %v928, 0.0
        %vm1028 = vcmp.gt.f32.partialorder %v993, 0.0
        %vm1029 = vcmp.gt.f32.partialorder %v931, 0.0
        %vm1030 = vcmp.gt.f32.partialorder %v996, 0.0
        %vm1031 = vcmp.gt.f32.partialorder %v934, 0.0
        %vm1032 = vcmp.gt.f32.partialorder %v999, 0.0
        %v1033 = vmul.f32 %v889, 0.2
        %v1034 = vmul.f32 %v954, 0.2
        %v1035 = vmul.f32 %v892, 0.2
        %v1036 = vmul.f32 %v957, 0.2
        %v1037 = vmul.f32 %v895, 0.2
        %v1038 = vmul.f32 %v960, 0.2
        %v1039 = vmul.f32 %v898, 0.2
        %v1040 = vmul.f32 %v963, 0.2
        %v1041 = vmul.f32 %v901, 0.2
        %v1042 = vmul.f32 %v966, 0.2
        %v1043 = vmul.f32 %v904, 0.2
        %v1044 = vmul.f32 %v969, 0.2
        %v1045 = vmul.f32 %v907, 0.2
        %v1046 = vmul.f32 %v972, 0.2
        %v1047 = vmul.f32 %v910, 0.2
        %v1048 = vmul.f32 %v975, 0.2
        %v1049 = vmul.f32 %v913, 0.2
        %v1050 = vmul.f32 %v978, 0.2
        %v1051 = vmul.f32 %v916, 0.2
        %v1052 = vmul.f32 %v981, 0.2
        %v1053 = vmul.f32 %v919, 0.2
        %v1054 = vmul.f32 %v984, 0.2
        %v1055 = vmul.f32 %v922, 0.2
        %v1056 = vmul.f32 %v987, 0.2
        %v1057 = vmul.f32 %v925, 0.2
        %v1058 = vmul.f32 %v990, 0.2
        %v1059 = vmul.f32 %v928, 0.2
        %v1060 = vmul.f32 %v993, 0.2
        %v1061 = vmul.f32 %v931, 0.2
        %v1062 = vmul.f32 %v996, 0.2
        %v1063 = vmul.f32 %v934, 0.2
        %v1064 = vmul.f32 %v999, 0.2
        %v1065 = vsel %vm1001, %v889, %v1033
        %v1066 = vsel %vm1002, %v954, %v1034
        %v1067 = vsel %vm1003, %v892, %v1035
        %v1068 = vsel %vm1004, %v957, %v1036
        %v1069 = vsel %vm1005, %v895, %v1037
        %v1070 = vsel %vm1006, %v960, %v1038
        %v1071 = vsel %vm1007, %v898, %v1039
        %v1072 = vsel %vm1008, %v963, %v1040
        %v1073 = vsel %vm1009, %v901, %v1041
        %v1074 = vsel %vm1010, %v966, %v1042
        %v1075 = vsel %vm1011, %v904, %v1043
        %v1076 = vsel %vm1012, %v969, %v1044
        %v1077 = vsel %vm1013, %v907, %v1045
        %v1078 = vsel %vm1014, %v972, %v1046
        %v1079 = vsel %vm1015, %v910, %v1047
        %v1080 = vsel %vm1016, %v975, %v1048
        %v1081 = vsel %vm1017, %v913, %v1049
        %v1082 = vsel %vm1018, %v978, %v1050
        %v1083 = vsel %vm1019, %v916, %v1051
        %v1084 = vsel %vm1020, %v981, %v1052
        %v1085 = vsel %vm1021, %v919, %v1053
        %v1086 = vsel %vm1022, %v984, %v1054
        %v1087 = vsel %vm1023, %v922, %v1055
        %v1088 = vsel %vm1024, %v987, %v1056
        %v1089 = vsel %vm1025, %v925, %v1057
        %v1090 = vsel %vm1026, %v990, %v1058
        %v1091 = vsel %vm1027, %v928, %v1059
        %v1092 = vsel %vm1028, %v993, %v1060
        %v1093 = vsel %vm1029, %v931, %v1061
        %v1094 = vsel %vm1030, %v996, %v1062
        %v1095 = vsel %vm1031, %v934, %v1063
        %v1096 = vsel %vm1032, %v999, %v1064
        %v1097 = vld [vmem:[%s7] sm:$0xff]
        %v1098 = vld [vmem:[%s7 + $0x8] sm:$0xff]
        %v1099 = vld [vmem:[%s7 + $0x10] sm:$0xff]
        %v1100 = vld [vmem:[%s7 + $0x18] sm:$0xff]
        %v1101 = vld [vmem:[%s7 + $0x20] sm:$0xff]
        %v1102 = vld [vmem:[%s7 + $0x28] sm:$0xff]
        %v1103 = vld [vmem:[%s7 + $0x30] sm:$0xff]
        %v1104 = vld [vmem:[%s7 + $0x38] sm:$0xff]
        %v1105 = vld [vmem:[%s7 + $0x40] sm:$0xff]
        %v1106 = vld [vmem:[%s7 + $0x48] sm:$0xff]
        %v1107 = vld [vmem:[%s7 + $0x50] sm:$0xff]
        %v1108 = vld [vmem:[%s7 + $0x58] sm:$0xff]
        %v1109 = vld [vmem:[%s7 + $0x60] sm:$0xff]
        %v1110 = vld [vmem:[%s7 + $0x68] sm:$0xff]
        %v1111 = vld [vmem:[%s7 + $0x70] sm:$0xff]
        %v1112 = vld [vmem:[%s7 + $0x78] sm:$0xff]
        %1114 = vset.pattern.permute.xlu0 0
        %1115 = vperm.xlu0 %1114, %v1097
        %v1116 = vpop.permute.xlu0 %1115
        %1119 = vset.pattern.permute.xlu0 0
        %1120 = vperm.xlu0 %1119, %v1098
        %v1121 = vpop.permute.xlu0 %1120
        %1124 = vset.pattern.permute.xlu0 0
        %1125 = vperm.xlu0 %1124, %v1099
        %v1126 = vpop.permute.xlu0 %1125
        %1129 = vset.pattern.permute.xlu0 0
        %1130 = vperm.xlu0 %1129, %v1100
        %v1131 = vpop.permute.xlu0 %1130
        %1134 = vset.pattern.permute.xlu0 0
        %1135 = vperm.xlu0 %1134, %v1101
        %v1136 = vpop.permute.xlu0 %1135
        %1139 = vset.pattern.permute.xlu0 0
        %1140 = vperm.xlu0 %1139, %v1102
        %v1141 = vpop.permute.xlu0 %1140
        %1144 = vset.pattern.permute.xlu0 0
        %1145 = vperm.xlu0 %1144, %v1103
        %v1146 = vpop.permute.xlu0 %1145
        %1149 = vset.pattern.permute.xlu0 0
        %1150 = vperm.xlu0 %1149, %v1104
        %v1151 = vpop.permute.xlu0 %1150
        %1154 = vset.pattern.permute.xlu0 0
        %1155 = vperm.xlu0 %1154, %v1105
        %v1156 = vpop.permute.xlu0 %1155
        %1159 = vset.pattern.permute.xlu0 0
        %1160 = vperm.xlu0 %1159, %v1106
        %v1161 = vpop.permute.xlu0 %1160
        %1164 = vset.pattern.permute.xlu0 0
        %1165 = vperm.xlu0 %1164, %v1107
        %v1166 = vpop.permute.xlu0 %1165
        %1169 = vset.pattern.permute.xlu0 0
        %1170 = vperm.xlu0 %1169, %v1108
        %v1171 = vpop.permute.xlu0 %1170
        %1174 = vset.pattern.permute.xlu0 0
        %1175 = vperm.xlu0 %1174, %v1109
        %v1176 = vpop.permute.xlu0 %1175
        %1179 = vset.pattern.permute.xlu0 0
        %1180 = vperm.xlu0 %1179, %v1110
        %v1181 = vpop.permute.xlu0 %1180
        %1184 = vset.pattern.permute.xlu0 0
        %1185 = vperm.xlu0 %1184, %v1111
        %v1186 = vpop.permute.xlu0 %1185
        %1189 = vset.pattern.permute.xlu0 0
        %1190 = vperm.xlu0 %1189, %v1112
        %v1191 = vpop.permute.xlu0 %1190
        %v1193 = vmul.f32 %v1065, %v1116
        %v1194 = vmul.f32 %v1066, %v1116
        %v1195 = vmul.f32 %v1067, %v1121
        %v1196 = vmul.f32 %v1068, %v1121
        %v1197 = vmul.f32 %v1069, %v1126
        %v1198 = vmul.f32 %v1070, %v1126
        %v1199 = vmul.f32 %v1071, %v1131
        %v1200 = vmul.f32 %v1072, %v1131
        %v1201 = vmul.f32 %v1073, %v1136
        %v1202 = vmul.f32 %v1074, %v1136
        %v1203 = vmul.f32 %v1075, %v1141
        %v1204 = vmul.f32 %v1076, %v1141
        %v1205 = vmul.f32 %v1077, %v1146
        %v1206 = vmul.f32 %v1078, %v1146
        %v1207 = vmul.f32 %v1079, %v1151
        %v1208 = vmul.f32 %v1080, %v1151
        %v1209 = vmul.f32 %v1081, %v1156
        %v1210 = vmul.f32 %v1082, %v1156
        %v1211 = vmul.f32 %v1083, %v1161
        %v1212 = vmul.f32 %v1084, %v1161
        %v1213 = vmul.f32 %v1085, %v1166
        %v1214 = vmul.f32 %v1086, %v1166
        %v1215 = vmul.f32 %v1087, %v1171
        %v1216 = vmul.f32 %v1088, %v1171
        %v1217 = vmul.f32 %v1089, %v1176
        %v1218 = vmul.f32 %v1090, %v1176
        %v1219 = vmul.f32 %v1091, %v1181
        %v1220 = vmul.f32 %v1092, %v1181
        %v1221 = vmul.f32 %v1093, %v1186
        %v1222 = vmul.f32 %v1094, %v1186
        %v1223 = vmul.f32 %v1095, %v1191
        %v1224 = vmul.f32 %v1096, %v1191
        %v1225 = vadd.f32 %v1193, %v1195
        %v1226 = vadd.f32 %v1225, %v1197
        %v1227 = vadd.f32 %v1226, %v1199
        %v1228 = vadd.f32 %v1227, %v1201
        %v1229 = vadd.f32 %v1228, %v1203
        %v1230 = vadd.f32 %v1229, %v1205
        %v1231 = vadd.f32 %v1230, %v1207
        %v1232 = vadd.f32 %v1231, %v1209
        %v1233 = vadd.f32 %v1232, %v1211
        %v1234 = vadd.f32 %v1233, %v1213
        %v1235 = vadd.f32 %v1234, %v1215
        %v1236 = vadd.f32 %v1235, %v1217
        %v1237 = vadd.f32 %v1236, %v1219
        %v1238 = vadd.f32 %v1237, %v1221
        %v1239 = vadd.f32 %v1238, %v1223
        %v1240 = vrot.slane %v1239, 4
        %v1241 = vadd.f32 %v1239, %v1240
        %v1242 = vrot.slane %v1241, 2
        %v1243 = vadd.f32 %v1241, %v1242
        %v1244 = vrot.slane %v1243, 1
        %v1245 = vadd.f32 %v1243, %v1244
        %v1246 = vadd.f32 %v1194, %v1196
        %v1247 = vadd.f32 %v1246, %v1198
        %v1248 = vadd.f32 %v1247, %v1200
        %v1249 = vadd.f32 %v1248, %v1202
        %v1250 = vadd.f32 %v1249, %v1204
        %v1251 = vadd.f32 %v1250, %v1206
        %v1252 = vadd.f32 %v1251, %v1208
        %v1253 = vadd.f32 %v1252, %v1210
        %v1254 = vadd.f32 %v1253, %v1212
        %v1255 = vadd.f32 %v1254, %v1214
        %v1256 = vadd.f32 %v1255, %v1216
        %v1257 = vadd.f32 %v1256, %v1218
        %v1258 = vadd.f32 %v1257, %v1220
        %v1259 = vadd.f32 %v1258, %v1222
        %v1260 = vadd.f32 %v1259, %v1224
        %v1261 = vrot.slane %v1260, 4
        %v1262 = vadd.f32 %v1260, %v1261
        %v1263 = vrot.slane %v1262, 2
        %v1264 = vadd.f32 %v1262, %v1263
        %v1265 = vrot.slane %v1264, 1
        %v1266 = vadd.f32 %v1264, %v1265
        %v1267 = vld [vmem:[#allocation2] sm:$0x1]
        %1269 = vset.pattern.permute.xlu0 0
        %1270 = vperm.xlu0 %1269, %v1267
        %v1271 = vpop.permute.xlu0 %1270
        %v1273 = vperm.slane %v1271, 0
        %v1274 = vadd.f32 %v1245, %v1273
        %v1275 = vadd.f32 %v1266, %v1273
        %v1278 = vrot.slane %v1275, 7
        %vm1279 = vcmask 1040384
        %v1280 = vsel %vm1279, %v1274, %v1278
        %v1282 = vlaneseq
        %vm1283 = vcmp.ge.s32.totalorder %v1282, 0
        %vm1284 = vcmp.lt.s32.totalorder %v1282, 256
        %vm1285 = vmand %vm1283, %vm1284
        %1286 = vst.msk [vmem:[%s352] sm:$0x3] %vm1285, %v1280
        %s1287 = sand.u32 %s243, 1
        %s1288 = scalar_lea.sflag [#allocation4], %s1287
        %s1289 = sand.u32 %s243, 1
        %s1290 = smul.addr %s1289, 2
        %s1291 = scalar_lea.vmem [#allocation3], %s1290
        // Predicated region
        $region57: #{tpu_custom_call.1} parent=55 // pred_check
          %p1292 = pneg %p253
        $region58: #{tpu_custom_call.1} parent=55 // pred_check_branch
          %1294 = sbr.rel (%p1292) target = $region60
        $region59: #{tpu_custom_call.1} parent=55 // pred_region
          %s1295 = smul.u32 2, %s30
          %1297 = vsyncadd %s1288, 0
          %s1298 = smul.addr %s29, 2
          %s1299 = sadd.s32 %s1295, %s1298
          %s1300 = scalar_lea.hbm %s9, %s1299
          %s1302 = sshll.u32 %s1291, 4
          %s1303 = int_to_ptr.vmem [resolvable:$true] %s1302
          %s1304 = sshll.u32 %s1300, 4
          %s1305 = int_to_ptr.hbm [resolvable:$true] %s1304
          %1307 = dma.vmem_to_hbm [thread:$0]  %s1303, 32, %s1305, %s1288
        $region60: #{tpu_custom_call.1} parent=55 // pred_fallthru
          _
      $region56: #{tpu_custom_call.1} parent=5 // pred_fallthru
        _
      %p1308 = scmp.le.s32.totalorder 2, %s20
      // Predicated region
      $region61: #{tpu_custom_call.1} parent=5 // pred_check
        %p1309 = pneg %p1308
      $region62: #{tpu_custom_call.1} parent=5 // pred_check_branch
        %1311 = sbr.rel (%p1309) target = $region64
      $region63: #{tpu_custom_call.1} parent=5 // pred_region
        %s1312 = ssub.s32 %s20, 2
        // Predicated region
        $region65: #{tpu_custom_call.1} parent=63 // pred_check
          %p1313 = pneg %p259
        $region66: #{tpu_custom_call.1} parent=63 // pred_check_branch
          %1315 = sbr.rel (%p1313) target = $region68
        $region67: #{tpu_custom_call.1} parent=63 // pred_region
          %s1316 = sand.u32 %s244, 1
          %s1317 = scalar_lea.sflag [#allocation4], %s1316
          %s1318 = sand.u32 %s244, 1
          %s1319 = smul.addr %s1318, 2
          %s1320 = scalar_lea.vmem [#allocation3], %s1319
          %1322 = dma.done %s1317, 32
        $region68: #{tpu_custom_call.1} parent=63 // pred_fallthru
          _
      $region64: #{tpu_custom_call.1} parent=5 // pred_fallthru
        _
    $region6: #{tpu_custom_call.1} parent=1 // loop_footer
      %s24 = sadd.s32 1, %s20
    $region7: #{tpu_custom_call.1} parent=1 // loop_footer_branch
      %19 = sbr.rel target = $region3
    $region8: #{tpu_custom_call.1} parent=1 // loop_exit
      _
    %1323 = vsyncpa [#allocation4], 1
    %s1324 = scalar_lea.sflag [#allocation4], 1
    %1325 = vsyncpa %s1324, 1

</llo_original>
